<compile_context>
chip_gen: v6e
topology: v6e:2x2x1
jax: 0.10.0
libtpu: 0.0.40
codegen_flags: <defaults>
</compile_context>

<pallas_src>
import jax
import jax.numpy as jnp
from jax.experimental import pallas as pl
from jax.experimental.pallas import tpu as pltpu


def _round_up(x, m):
    return pl.cdiv(x, m) * m


def ae0_kernel(char_ref, ptfs_ref, w1_ref, b1_ref, wet_ref, be_ref, out_ref):
    # char_ref: (Tb, Pc, Nb)  characteristics, assets on lanes (stream dtype, e.g. bf16)
    # ptfs_ref: (Tb, P)       managed-portfolio returns (stream dtype)
    # w1_ref:   (F, Pc) f32   beta_l1 weight (PyTorch layout)
    # b1_ref:   (1, F)  f32   beta_l1 bias
    # wet_ref:  (P, F)        encoder weight, transposed (stream dtype)
    # be_ref:   (1, F)  f32   encoder bias
    # out_ref:  (Tb, Nb) f32
    Tb, Pc, _ = char_ref.shape
    F = wet_ref.shape[1]

    # ---- factor network: factors[t] = encoder(ptfs[t])  (tiny MXU matmul, f32 accumulate) ----
    factors = jnp.dot(ptfs_ref[...], wet_ref[...],
                      preferred_element_type=jnp.float32) + be_ref[...]           # (Tb, F) f32

    # ---- fold the F-contraction into the beta weights (exact f32 VPU math, F is tiny) ----
    #   out[t,n] = sum_f (sum_p char[t,n,p] w1[f,p] + b1[f]) * factors[t,f]
    #            = sum_p char[t,n,p] * v[t,p] + c[t]
    v = jnp.zeros((Tb, Pc), jnp.float32)       # v[t,p] = sum_f factors[t,f] * w1[f,p]
    c = jnp.zeros((Tb, 1), jnp.float32)        # c[t]   = sum_f factors[t,f] * b1[f]
    for f in range(F):                         # static unroll, F ~ 4
        ff = factors[:, f:f + 1]                                                   # (Tb, 1)
        v = v + ff * w1_ref[f:f + 1, :]                                            # (Tb, Pc)
        c = c + ff * b1_ref[:, f:f + 1]                                            # (Tb, 1)

    # ---- prediction: short unrolled VPU FMA loop over Pc; assets stay lane-dense ----
    acc = jnp.zeros(out_ref.shape, jnp.float32)                                    # (Tb, Nb)
    for p in range(Pc):                        # static unroll, Pc small (~10-100)
        acc = acc + char_ref[:, p, :].astype(jnp.float32) * v[:, p:p + 1]
    out_ref[...] = acc + c


def _pick_tiles(T, N_pad, Pc, P, stream_itemsize):
    """Pick the time-block size and VMEM limit for the current TPU generation."""
    try:
        vmem_cap = int(pltpu.get_tpu_info().vmem_capacity_bytes)  # 64 MiB v7x, 128 MiB v5e/v6e
    except Exception:
        vmem_cap = 64 * 1024 * 1024                               # conservative fallback (v7x)
    vmem_limit = max(32 * 1024 * 1024, min(vmem_cap * 3 // 4, 112 * 1024 * 1024))

    # VMEM bytes needed per time step (accounting for sublane/lane padding of the tiles).
    sub = 32 // max(stream_itemsize, 1)
    char_row = _round_up(Pc, sub) * N_pad * stream_itemsize
    out_row = N_pad * 4
    ptfs_row = _round_up(P, 128) * stream_itemsize
    per_t = 2 * (char_row + out_row + ptfs_row) + out_row         # double buffers + f32 accumulator

    budget = (vmem_limit * 7) // 10                               # headroom: weights + Mosaic scratch
    tb = max(8, (budget // per_t) // 8 * 8)
    tb = min(tb, 1024)                                            # MiB-scale tiles; no gain past this
    tb = min(tb, max(8, _round_up(pl.cdiv(T, 4), 8)))             # keep >= ~4 blocks (megacore + pipeline)
    return int(tb), int(vmem_limit)


def ae0_forward(char, ptfs, params, *, block_t=None, compute_dtype=jnp.bfloat16,
                char_is_tpn=False):
    """AE0.forward (eval mode) on TPU.

    char: (T, N, Pc) -- or (T, Pc, N) if char_is_tpn=True (pre-relayouted; amortizes the
          one-time host-side transpose/cast across calls).
    ptfs: (T, P).  Weights follow PyTorch Linear layout: w1 (F, Pc), we (F, P).
    """
    if char_is_tpn:
        T, Pc, N = char.shape
    else:
        T, N, Pc = char.shape
    T2, P = ptfs.shape
    assert T2 == T
    F = params["w1"].shape[0]

    cd = jnp.dtype(compute_dtype)
    N_pad = _round_up(N, 128)                 # lane-dense asset axis (input rows & output stores)

    if block_t is None:
        Tb, vmem_limit = _pick_tiles(T, N_pad, Pc, P, cd.itemsize)
    else:
        Tb = max(8, _round_up(int(block_t), 8))
        _, vmem_limit = _pick_tiles(T, N_pad, Pc, P, cd.itemsize)
    T_pad = _round_up(T, Tb)

    # Single fused relayout pass over char: (T, N, Pc) -> (T, Pc, N_pad) in the streaming dtype.
    char_t = char.astype(cd) if char_is_tpn else jnp.swapaxes(char, 1, 2).astype(cd)
    char_c = jnp.pad(char_t, ((0, T_pad - T), (0, 0), (0, N_pad - N)))            # (T_pad, Pc, N_pad)
    ptfs_c = jnp.pad(ptfs.astype(cd), ((0, T_pad - T), (0, 0)))                   # (T_pad, P)

    w1 = params["w1"].astype(jnp.float32)                  # (F, Pc)  f32, tiny & resident
    b1 = params["b1"].astype(jnp.float32)[None, :]         # (1, F)
    wet = params["we"].T.astype(cd)                        # (P, F)
    be = params["be"].astype(jnp.float32)[None, :]         # (1, F)

    out = pl.pallas_call(
        ae0_kernel,
        out_shape=jax.ShapeDtypeStruct((T_pad, N_pad), jnp.float32),
        grid_spec=pltpu.PrefetchScalarGridSpec(
            num_scalar_prefetch=0,
            grid=(T_pad // Tb,),
            in_specs=[
                pl.BlockSpec((Tb, Pc, N_pad), lambda tb: (tb, 0, 0)),  # char tile (pipelined)
                pl.BlockSpec((Tb, P), lambda tb: (tb, 0)),             # ptfs tile (pipelined)
                pl.BlockSpec((F, Pc), lambda tb: (0, 0)),              # W1 (resident, tiny)
                pl.BlockSpec((1, F), lambda tb: (0, 0)),               # b1
                pl.BlockSpec((P, F), lambda tb: (0, 0)),               # We^T
                pl.BlockSpec((1, F), lambda tb: (0, 0)),               # be
            ],
            out_specs=pl.BlockSpec((Tb, N_pad), lambda tb: (tb, 0)),   # lane-dense output tile
        ),
        compiler_params=pltpu.CompilerParams(
            dimension_semantics=("parallel",),    # independent time blocks -> megacore on v7x
            vmem_limit_bytes=vmem_limit,          # ~48 MiB on v7x, ~96 MiB on v5e/v6e
        ),
    )(char_c, ptfs_c, w1, b1, wet, be)

    # Padded rows/columns hold garbage (the bias propagates) -- slice before returning.
    return out[:T, :N]


def init_params(key, nb_char, nb_ptfs, nb_fctr):
    ks = jax.random.split(key, 4)

    def linear_init(kw, kb, fan_in, fan_out):
        bound = 1.0 / float(fan_in) ** 0.5
        w = jax.random.uniform(kw, (fan_out, fan_in), jnp.float32, -bound, bound)
        b = jax.random.uniform(kb, (fan_out,), jnp.float32, -bound, bound)
        return w, b

    w1, b1 = linear_init(ks[0], ks[1], nb_char, nb_fctr)   # beta_l1: Linear(nb_char -> nb_fctr)
    we, be = linear_init(ks[2], ks[3], nb_ptfs, nb_fctr)   # encoder: Linear(nb_ptfs -> nb_fctr)
    return dict(w1=w1, b1=b1, we=we, be=be)


def ae0_reference(char, ptfs, params, compute_dtype=jnp.bfloat16):
    """Pure-JAX reference of AE0.forward (eval mode).

    Rounds char/ptfs/we to compute_dtype exactly as the kernel wrapper does (w1/b1/be stay
    f32) and accumulates everything in f32 at HIGHEST precision.
    """
    hp = jax.lax.Precision.HIGHEST
    r = lambda a: a.astype(compute_dtype).astype(jnp.float32)
    T, N, Pc = char.shape
    F = params["w1"].shape[0]
    x = r(char).reshape(T * N, Pc)                                                   # dropout = id
    loadings = (jnp.dot(x, params["w1"].T, precision=hp) + params["b1"]).reshape(T, N, F)
    factors = (jnp.dot(r(ptfs), r(params["we"]).T, precision=hp) + params["be"]).reshape(T, F, 1)
    return jnp.squeeze(jnp.matmul(loadings, factors, precision=hp), axis=-1)         # (T, N)


if __name__ == "__main__":
    T, N, Pc, P, F = 16, 16, 10, 16, 4          # nb_char=10, nb_ptfs=16, nb_fctr=4
    key = jax.random.PRNGKey(0)
    k1, k2, k3 = jax.random.split(key, 3)
    char = jax.random.normal(k1, (T, N, Pc), jnp.float32)
    ptfs = jax.random.normal(k2, (T, P), jnp.float32)
    params = init_params(k3, Pc, P, F)

    out = ae0_forward(char, ptfs, params, compute_dtype=jnp.bfloat16)
    jax.block_until_ready(out)

    ref = ae0_reference(char, ptfs, params, compute_dtype=jnp.bfloat16)
    assert out.shape == (T, N), out.shape
    err = float(jnp.max(jnp.abs(out - ref)))
    assert jnp.allclose(out, ref, atol=2e-3, rtol=2e-3), err
    print("KERNEL_OK")
</pallas_src>

<mosaic_0001>
module attributes {stable_mosaic.version = 11 : i64} {
  func.func @ae0_kernel(%arg0: i32, %arg1: memref<8x10x128xbf16, #tpu.memory_space<vmem>>, %arg2: memref<8x16xbf16, #tpu.memory_space<vmem>>, %arg3: memref<4x10xf32, #tpu.memory_space<vmem>>, %arg4: memref<1x4xf32, #tpu.memory_space<vmem>>, %arg5: memref<16x4xbf16, #tpu.memory_space<vmem>>, %arg6: memref<1x4xf32, #tpu.memory_space<vmem>>, %arg7: memref<8x128xf32, #tpu.memory_space<vmem>>) attributes {dimension_semantics = [#tpu.dimension_semantics<parallel>], iteration_bounds = array<i64: 2>, scalar_prefetch = 0 : i64, scratch_operands = 0 : i64, tpu.core_type = #tpu.core_type<tc>, window_params = [{transform_indices = @transform_0, window_bounds = array<i64: 8, 10, 128>}, {transform_indices = @transform_1, window_bounds = array<i64: 8, 16>}, {pipeline_mode = #tpu.pipeline_mode<synchronous>, transform_indices = @transform_2, window_bounds = array<i64: 4, 10>}, {pipeline_mode = #tpu.pipeline_mode<synchronous>, transform_indices = @transform_3, window_bounds = array<i64: 1, 4>}, {pipeline_mode = #tpu.pipeline_mode<synchronous>, transform_indices = @transform_4, window_bounds = array<i64: 16, 4>}, {pipeline_mode = #tpu.pipeline_mode<synchronous>, transform_indices = @transform_5, window_bounds = array<i64: 1, 4>}, {transform_indices = @transform_6, window_bounds = array<i64: 8, 128>}]} {
    %c0 = arith.constant 0 : index
    %c0_0 = arith.constant 0 : index
    %0 = vector.load %arg2[%c0, %c0_0] : memref<8x16xbf16, #tpu.memory_space<vmem>>, vector<8x16xbf16>
    %c0_1 = arith.constant 0 : index
    %c0_2 = arith.constant 0 : index
    %1 = vector.load %arg5[%c0_1, %c0_2] : memref<16x4xbf16, #tpu.memory_space<vmem>>, vector<16x4xbf16>
    %cst = arith.constant dense<0.000000e+00> : vector<8x4xf32>
    %2 = tpu.matmul %0, %1, %cst {dimension_numbers = #tpu.dot_dimension_numbers<[1], [0], [0], [1], [0, 0, 1, 1], [], []>} : vector<8x16xbf16>, vector<16x4xbf16>, vector<8x4xf32> -> vector<8x4xf32>
    %c0_3 = arith.constant 0 : index
    %c0_4 = arith.constant 0 : index
    %3 = vector.load %arg6[%c0_3, %c0_4] : memref<1x4xf32, #tpu.memory_space<vmem>>, vector<1x4xf32>
    %4 = vector.broadcast %3 : vector<1x4xf32> to vector<8x4xf32>
    %5 = arith.addf %2, %4 : vector<8x4xf32>
    %cst_5 = arith.constant 0.000000e+00 : f32
    %6 = vector.broadcast %cst_5 : f32 to vector<8x10xf32>
    %cst_6 = arith.constant 0.000000e+00 : f32
    %7 = vector.broadcast %cst_6 : f32 to vector<8x1xf32>
    %8 = vector.extract_strided_slice %5 {offsets = [0, 0], sizes = [8, 1], strides = [1, 1]} : vector<8x4xf32> to vector<8x1xf32>
    %c0_7 = arith.constant 0 : index
    %c0_8 = arith.constant 0 : index
    %9 = vector.load %arg3[%c0_7, %c0_8] : memref<4x10xf32, #tpu.memory_space<vmem>>, vector<1x10xf32>
    %10 = vector.broadcast %8 : vector<8x1xf32> to vector<8x10xf32>
    %11 = vector.broadcast %9 : vector<1x10xf32> to vector<8x10xf32>
    %12 = arith.mulf %10, %11 : vector<8x10xf32>
    %13 = arith.addf %6, %12 : vector<8x10xf32>
    %c0_9 = arith.constant 0 : index
    %c0_10 = arith.constant 0 : index
    %14 = vector.load %arg4[%c0_9, %c0_10] : memref<1x4xf32, #tpu.memory_space<vmem>>, vector<1x1xf32>
    %15 = vector.broadcast %14 : vector<1x1xf32> to vector<8x1xf32>
    %16 = arith.mulf %8, %15 : vector<8x1xf32>
    %17 = arith.addf %7, %16 : vector<8x1xf32>
    %18 = vector.extract_strided_slice %5 {offsets = [0, 1], sizes = [8, 1], strides = [1, 1]} : vector<8x4xf32> to vector<8x1xf32>
    %c1 = arith.constant 1 : index
    %c0_11 = arith.constant 0 : index
    %19 = vector.load %arg3[%c1, %c0_11] : memref<4x10xf32, #tpu.memory_space<vmem>>, vector<1x10xf32>
    %20 = vector.broadcast %18 : vector<8x1xf32> to vector<8x10xf32>
    %21 = vector.broadcast %19 : vector<1x10xf32> to vector<8x10xf32>
    %22 = arith.mulf %20, %21 : vector<8x10xf32>
    %23 = arith.addf %13, %22 : vector<8x10xf32>
    %c0_12 = arith.constant 0 : index
    %c1_13 = arith.constant 1 : index
    %24 = vector.load %arg4[%c0_12, %c1_13] : memref<1x4xf32, #tpu.memory_space<vmem>>, vector<1x1xf32>
    %25 = vector.broadcast %24 : vector<1x1xf32> to vector<8x1xf32>
    %26 = arith.mulf %18, %25 : vector<8x1xf32>
    %27 = arith.addf %17, %26 : vector<8x1xf32>
    %28 = vector.extract_strided_slice %5 {offsets = [0, 2], sizes = [8, 1], strides = [1, 1]} : vector<8x4xf32> to vector<8x1xf32>
    %c2 = arith.constant 2 : index
    %c0_14 = arith.constant 0 : index
    %29 = vector.load %arg3[%c2, %c0_14] : memref<4x10xf32, #tpu.memory_space<vmem>>, vector<1x10xf32>
    %30 = vector.broadcast %28 : vector<8x1xf32> to vector<8x10xf32>
    %31 = vector.broadcast %29 : vector<1x10xf32> to vector<8x10xf32>
    %32 = arith.mulf %30, %31 : vector<8x10xf32>
    %33 = arith.addf %23, %32 : vector<8x10xf32>
    %c0_15 = arith.constant 0 : index
    %c2_16 = arith.constant 2 : index
    %34 = vector.load %arg4[%c0_15, %c2_16] : memref<1x4xf32, #tpu.memory_space<vmem>>, vector<1x1xf32>
    %35 = vector.broadcast %34 : vector<1x1xf32> to vector<8x1xf32>
    %36 = arith.mulf %28, %35 : vector<8x1xf32>
    %37 = arith.addf %27, %36 : vector<8x1xf32>
    %38 = vector.extract_strided_slice %5 {offsets = [0, 3], sizes = [8, 1], strides = [1, 1]} : vector<8x4xf32> to vector<8x1xf32>
    %c3 = arith.constant 3 : index
    %c0_17 = arith.constant 0 : index
    %39 = vector.load %arg3[%c3, %c0_17] : memref<4x10xf32, #tpu.memory_space<vmem>>, vector<1x10xf32>
    %40 = vector.broadcast %38 : vector<8x1xf32> to vector<8x10xf32>
    %41 = vector.broadcast %39 : vector<1x10xf32> to vector<8x10xf32>
    %42 = arith.mulf %40, %41 : vector<8x10xf32>
    %43 = arith.addf %33, %42 : vector<8x10xf32>
    %c0_18 = arith.constant 0 : index
    %c3_19 = arith.constant 3 : index
    %44 = vector.load %arg4[%c0_18, %c3_19] : memref<1x4xf32, #tpu.memory_space<vmem>>, vector<1x1xf32>
    %45 = vector.broadcast %44 : vector<1x1xf32> to vector<8x1xf32>
    %46 = arith.mulf %38, %45 : vector<8x1xf32>
    %47 = arith.addf %37, %46 : vector<8x1xf32>
    %cst_20 = arith.constant 0.000000e+00 : f32
    %48 = vector.broadcast %cst_20 : f32 to vector<8x128xf32>
    %c0_21 = arith.constant 0 : index
    %c0_22 = arith.constant 0 : index
    %c0_23 = arith.constant 0 : index
    %49 = vector.load %arg1[%c0_21, %c0_22, %c0_23] : memref<8x10x128xbf16, #tpu.memory_space<vmem>>, vector<8x1x128xbf16>
    %50 = vector.shape_cast %49 : vector<8x1x128xbf16> to vector<8x128xbf16>
    %51 = arith.extf %50 : vector<8x128xbf16> to vector<8x128xf32>
    %52 = vector.extract_strided_slice %43 {offsets = [0, 0], sizes = [8, 1], strides = [1, 1]} : vector<8x10xf32> to vector<8x1xf32>
    %53 = vector.broadcast %52 : vector<8x1xf32> to vector<8x128xf32>
    %54 = arith.mulf %51, %53 : vector<8x128xf32>
    %55 = arith.addf %48, %54 : vector<8x128xf32>
    %c0_24 = arith.constant 0 : index
    %c1_25 = arith.constant 1 : index
    %c0_26 = arith.constant 0 : index
    %56 = vector.load %arg1[%c0_24, %c1_25, %c0_26] : memref<8x10x128xbf16, #tpu.memory_space<vmem>>, vector<8x1x128xbf16>
    %57 = vector.shape_cast %56 : vector<8x1x128xbf16> to vector<8x128xbf16>
    %58 = arith.extf %57 : vector<8x128xbf16> to vector<8x128xf32>
    %59 = vector.extract_strided_slice %43 {offsets = [0, 1], sizes = [8, 1], strides = [1, 1]} : vector<8x10xf32> to vector<8x1xf32>
    %60 = vector.broadcast %59 : vector<8x1xf32> to vector<8x128xf32>
    %61 = arith.mulf %58, %60 : vector<8x128xf32>
    %62 = arith.addf %55, %61 : vector<8x128xf32>
    %c0_27 = arith.constant 0 : index
    %c2_28 = arith.constant 2 : index
    %c0_29 = arith.constant 0 : index
    %63 = vector.load %arg1[%c0_27, %c2_28, %c0_29] : memref<8x10x128xbf16, #tpu.memory_space<vmem>>, vector<8x1x128xbf16>
    %64 = vector.shape_cast %63 : vector<8x1x128xbf16> to vector<8x128xbf16>
    %65 = arith.extf %64 : vector<8x128xbf16> to vector<8x128xf32>
    %66 = vector.extract_strided_slice %43 {offsets = [0, 2], sizes = [8, 1], strides = [1, 1]} : vector<8x10xf32> to vector<8x1xf32>
    %67 = vector.broadcast %66 : vector<8x1xf32> to vector<8x128xf32>
    %68 = arith.mulf %65, %67 : vector<8x128xf32>
    %69 = arith.addf %62, %68 : vector<8x128xf32>
    %c0_30 = arith.constant 0 : index
    %c3_31 = arith.constant 3 : index
    %c0_32 = arith.constant 0 : index
    %70 = vector.load %arg1[%c0_30, %c3_31, %c0_32] : memref<8x10x128xbf16, #tpu.memory_space<vmem>>, vector<8x1x128xbf16>
    %71 = vector.shape_cast %70 : vector<8x1x128xbf16> to vector<8x128xbf16>
    %72 = arith.extf %71 : vector<8x128xbf16> to vector<8x128xf32>
    %73 = vector.extract_strided_slice %43 {offsets = [0, 3], sizes = [8, 1], strides = [1, 1]} : vector<8x10xf32> to vector<8x1xf32>
    %74 = vector.broadcast %73 : vector<8x1xf32> to vector<8x128xf32>
    %75 = arith.mulf %72, %74 : vector<8x128xf32>
    %76 = arith.addf %69, %75 : vector<8x128xf32>
    %c0_33 = arith.constant 0 : index
    %c4 = arith.constant 4 : index
    %c0_34 = arith.constant 0 : index
    %77 = vector.load %arg1[%c0_33, %c4, %c0_34] : memref<8x10x128xbf16, #tpu.memory_space<vmem>>, vector<8x1x128xbf16>
    %78 = vector.shape_cast %77 : vector<8x1x128xbf16> to vector<8x128xbf16>
    %79 = arith.extf %78 : vector<8x128xbf16> to vector<8x128xf32>
    %80 = vector.extract_strided_slice %43 {offsets = [0, 4], sizes = [8, 1], strides = [1, 1]} : vector<8x10xf32> to vector<8x1xf32>
    %81 = vector.broadcast %80 : vector<8x1xf32> to vector<8x128xf32>
    %82 = arith.mulf %79, %81 : vector<8x128xf32>
    %83 = arith.addf %76, %82 : vector<8x128xf32>
    %c0_35 = arith.constant 0 : index
    %c5 = arith.constant 5 : index
    %c0_36 = arith.constant 0 : index
    %84 = vector.load %arg1[%c0_35, %c5, %c0_36] : memref<8x10x128xbf16, #tpu.memory_space<vmem>>, vector<8x1x128xbf16>
    %85 = vector.shape_cast %84 : vector<8x1x128xbf16> to vector<8x128xbf16>
    %86 = arith.extf %85 : vector<8x128xbf16> to vector<8x128xf32>
    %87 = vector.extract_strided_slice %43 {offsets = [0, 5], sizes = [8, 1], strides = [1, 1]} : vector<8x10xf32> to vector<8x1xf32>
    %88 = vector.broadcast %87 : vector<8x1xf32> to vector<8x128xf32>
    %89 = arith.mulf %86, %88 : vector<8x128xf32>
    %90 = arith.addf %83, %89 : vector<8x128xf32>
    %c0_37 = arith.constant 0 : index
    %c6 = arith.constant 6 : index
    %c0_38 = arith.constant 0 : index
    %91 = vector.load %arg1[%c0_37, %c6, %c0_38] : memref<8x10x128xbf16, #tpu.memory_space<vmem>>, vector<8x1x128xbf16>
    %92 = vector.shape_cast %91 : vector<8x1x128xbf16> to vector<8x128xbf16>
    %93 = arith.extf %92 : vector<8x128xbf16> to vector<8x128xf32>
    %94 = vector.extract_strided_slice %43 {offsets = [0, 6], sizes = [8, 1], strides = [1, 1]} : vector<8x10xf32> to vector<8x1xf32>
    %95 = vector.broadcast %94 : vector<8x1xf32> to vector<8x128xf32>
    %96 = arith.mulf %93, %95 : vector<8x128xf32>
    %97 = arith.addf %90, %96 : vector<8x128xf32>
    %c0_39 = arith.constant 0 : index
    %c7 = arith.constant 7 : index
    %c0_40 = arith.constant 0 : index
    %98 = vector.load %arg1[%c0_39, %c7, %c0_40] : memref<8x10x128xbf16, #tpu.memory_space<vmem>>, vector<8x1x128xbf16>
    %99 = vector.shape_cast %98 : vector<8x1x128xbf16> to vector<8x128xbf16>
    %100 = arith.extf %99 : vector<8x128xbf16> to vector<8x128xf32>
    %101 = vector.extract_strided_slice %43 {offsets = [0, 7], sizes = [8, 1], strides = [1, 1]} : vector<8x10xf32> to vector<8x1xf32>
    %102 = vector.broadcast %101 : vector<8x1xf32> to vector<8x128xf32>
    %103 = arith.mulf %100, %102 : vector<8x128xf32>
    %104 = arith.addf %97, %103 : vector<8x128xf32>
    %c0_41 = arith.constant 0 : index
    %c8 = arith.constant 8 : index
    %c0_42 = arith.constant 0 : index
    %105 = vector.load %arg1[%c0_41, %c8, %c0_42] : memref<8x10x128xbf16, #tpu.memory_space<vmem>>, vector<8x1x128xbf16>
    %106 = vector.shape_cast %105 : vector<8x1x128xbf16> to vector<8x128xbf16>
    %107 = arith.extf %106 : vector<8x128xbf16> to vector<8x128xf32>
    %108 = vector.extract_strided_slice %43 {offsets = [0, 8], sizes = [8, 1], strides = [1, 1]} : vector<8x10xf32> to vector<8x1xf32>
    %109 = vector.broadcast %108 : vector<8x1xf32> to vector<8x128xf32>
    %110 = arith.mulf %107, %109 : vector<8x128xf32>
    %111 = arith.addf %104, %110 : vector<8x128xf32>
    %c0_43 = arith.constant 0 : index
    %c9 = arith.constant 9 : index
    %c0_44 = arith.constant 0 : index
    %112 = vector.load %arg1[%c0_43, %c9, %c0_44] : memref<8x10x128xbf16, #tpu.memory_space<vmem>>, vector<8x1x128xbf16>
    %113 = vector.shape_cast %112 : vector<8x1x128xbf16> to vector<8x128xbf16>
    %114 = arith.extf %113 : vector<8x128xbf16> to vector<8x128xf32>
    %115 = vector.extract_strided_slice %43 {offsets = [0, 9], sizes = [8, 1], strides = [1, 1]} : vector<8x10xf32> to vector<8x1xf32>
    %116 = vector.broadcast %115 : vector<8x1xf32> to vector<8x128xf32>
    %117 = arith.mulf %114, %116 : vector<8x128xf32>
    %118 = arith.addf %111, %117 : vector<8x128xf32>
    %119 = vector.broadcast %47 : vector<8x1xf32> to vector<8x128xf32>
    %120 = arith.addf %118, %119 : vector<8x128xf32>
    %c0_45 = arith.constant 0 : index
    %c0_46 = arith.constant 0 : index
    %121 = vector.load %arg7[%c0_45, %c0_46] : memref<8x128xf32, #tpu.memory_space<vmem>>, vector<8x128xf32>
    tpu.vector_store %arg7[%c0_45, %c0_46], %120 {strides = array<i32>} : memref<8x128xf32, #tpu.memory_space<vmem>>, vector<8x128xf32>,
    return
  }
  func.func @transform_0(%arg0: i32) -> (i32, i32, i32) {
    %c0_i32 = arith.constant 0 : i32
    %c0_i32_0 = arith.constant 0 : i32
    %c0_i32_1 = arith.constant 0 : i32
    return %arg0, %c0_i32, %c0_i32_0 : i32, i32, i32
  }
  func.func @transform_1(%arg0: i32) -> (i32, i32) {
    %c0_i32 = arith.constant 0 : i32
    %c0_i32_0 = arith.constant 0 : i32
    return %arg0, %c0_i32 : i32, i32
  }
  func.func @transform_2(%arg0: i32) -> (i32, i32) {
    %c0_i32 = arith.constant 0 : i32
    %c0_i32_0 = arith.constant 0 : i32
    %c0_i32_1 = arith.constant 0 : i32
    return %c0_i32, %c0_i32_0 : i32, i32
  }
  func.func @transform_3(%arg0: i32) -> (i32, i32) {
    %c0_i32 = arith.constant 0 : i32
    %c0_i32_0 = arith.constant 0 : i32
    %c0_i32_1 = arith.constant 0 : i32
    return %c0_i32, %c0_i32_0 : i32, i32
  }
  func.func @transform_4(%arg0: i32) -> (i32, i32) {
    %c0_i32 = arith.constant 0 : i32
    %c0_i32_0 = arith.constant 0 : i32
    %c0_i32_1 = arith.constant 0 : i32
    return %c0_i32, %c0_i32_0 : i32, i32
  }
  func.func @transform_5(%arg0: i32) -> (i32, i32) {
    %c0_i32 = arith.constant 0 : i32
    %c0_i32_0 = arith.constant 0 : i32
    %c0_i32_1 = arith.constant 0 : i32
    return %c0_i32, %c0_i32_0 : i32, i32
  }
  func.func @transform_6(%arg0: i32) -> (i32, i32) {
    %c0_i32 = arith.constant 0 : i32
    %c0_i32_0 = arith.constant 0 : i32
    return %arg0, %c0_i32 : i32, i32
  }
}

</mosaic_0001>

<llo_original>
// kernel: tpu_custom_call.1
$region0: #{tpu_custom_call.1}
  #allocation0 [shape = 'u32[]', space=smem, size = 0x4, offset = 0x4, fixed_abs, tag = 'smem constant byte address 0x4 - core index']
  #allocation1 [shape = 'u32[144,128]{1,0:T(1,128)}', space=vmem, size = 0x12000, scoped, tag = 'internal scratch']
  %s0 = inlined_call_operand.vmem [shape: bf16[16,10,128], index: 0, kind: input, shape index: {}]
  %s1 = inlined_call_operand.vmem [shape: bf16[16,16], index: 1, kind: input, shape index: {}]
  %s2 = inlined_call_operand.vmem [shape: f32[4,10], index: 2, kind: input, shape index: {}]
  %s3 = inlined_call_operand.vmem [shape: f32[1,4], index: 3, kind: input, shape index: {}]
  %s4 = inlined_call_operand.vmem [shape: bf16[16,4], index: 4, kind: input, shape index: {}]
  %s5 = inlined_call_operand.vmem [shape: f32[1,4], index: 5, kind: input, shape index: {}]
  %s6 = inlined_call_operand.hbm [shape: f32[16,128], index: 6, kind: output, shape index: {}]
  %s7 = sld [smem:[#allocation0]]
  $region57: #{tpu_custom_call.1} parent=0
    _
  %s9 = ssub.s32 1, %s7
  %s10 = scalar_select 0, %s9, %s7
  $region1: #{tpu_custom_call.1} parent=0
    #allocation2 [shape = 'u8[8192]{0}', space=vmem, size = 0x2000, scoped, tag = 'output window, operand 0']
    #allocation3 [shape = 's32[2]{0}', space=sflag, size = 0x8, scoped, tag = 'scoped memory for tpu_custom_call.1']
    %11 = vsyncpa [#allocation3], 0
    %s12 = scalar_lea.sflag [#allocation3], 1
    %13 = vsyncpa %s12, 0
    loop: start=0, step=1, limit=4
    $region2: #{tpu_custom_call.1} parent=1 // loop_pre_header
      _
    $region3: #{tpu_custom_call.1} parent=1 // loop_header
      %s15 = sphi 0, %s19
      %p16 = scmp.ge.s32.totalorder %s15, 4
      %s25 = sphi 0, %s27
      %s28 = sphi 0, %s25
      %s29 = sphi 0, %s28
      %s45 = sphi 0, %s29
      %s51 = sphi 0, %s53
      %s54 = sphi 0, %s51
      %s55 = sphi 0, %s54
      %s71 = sphi 0, %s55
      %s75 = sphi 0, %s75
      %s77 = sphi 0, %s75
      %s78 = sphi 0, %s77
      %s92 = sphi 0, %s78
      %s96 = sphi 0, %s96
      %s98 = sphi 0, %s96
      %s99 = sphi 0, %s98
      %s113 = sphi 0, %s99
      %s117 = sphi 0, %s117
      %s119 = sphi 0, %s117
      %s120 = sphi 0, %s119
      %s134 = sphi 0, %s120
      %s138 = sphi 0, %s138
      %s140 = sphi 0, %s138
      %s141 = sphi 0, %s140
      %s155 = sphi 0, %s141
      %s161 = sphi 0, %s163
      %s164 = sphi 0, %s161
      %s165 = sphi 0, %s164
      %s181 = sphi 0, %s165
    $region4: #{tpu_custom_call.1} parent=1 // loop_header_branch
      %18 = sbr.rel (%p16) target = $region8
    $region5: #{tpu_custom_call.1} parent=1 // loop_body
      %s20 = ssub.s32 %s15, 1
      %s21 = ssub.s32 %s15, 2
      %s22 = sadd.s32 %s15, 1
      %s23 = ssub.s32 %s15, %s22
      %p24 = scmp.eq.s32.totalorder %s23, 0
      %s26 = sadd.s32 %s25, 1
      %s27 = scalar_select %p24, %s25, %s26
      %p30 = pneg %p24
      %p31 = scmp.eq.s32.totalorder %s15, 1
      %p32 = por %p30, %p31
      %p33 = scmp.ne.s32.totalorder %s25, %s28
      %p34 = scmp.eq.s32.totalorder %s15, 0
      %p35 = por %p33, %p34
      %p36 = scmp.ne.s32.totalorder %s25, %s28
      %p37 = scmp.eq.s32.totalorder %s20, 1
      %p38 = por %p36, %p37
      %p39 = scmp.ne.s32.totalorder %s28, %s29
      %p40 = scmp.eq.s32.totalorder %s20, 0
      %p41 = por %p39, %p40
      %p42 = scmp.ne.s32.totalorder %s28, %s29
      %p43 = scmp.eq.s32.totalorder %s21, 1
      %p44 = por %p42, %p43
      %p46 = scmp.ne.s32.totalorder %s29, %s45
      %p47 = scmp.eq.s32.totalorder %s21, 0
      %p48 = por %p46, %p47
      %s49 = ssub.s32 %s15, %s22
      %p50 = scmp.eq.s32.totalorder %s49, 0
      %s52 = sadd.s32 %s51, 1
      %s53 = scalar_select %p50, %s51, %s52
      %p56 = pneg %p50
      %p57 = scmp.eq.s32.totalorder %s15, 1
      %p58 = por %p56, %p57
      %p59 = scmp.ne.s32.totalorder %s51, %s54
      %p60 = scmp.eq.s32.totalorder %s15, 0
      %p61 = por %p59, %p60
      %p62 = scmp.ne.s32.totalorder %s51, %s54
      %p63 = scmp.eq.s32.totalorder %s20, 1
      %p64 = por %p62, %p63
      %p65 = scmp.ne.s32.totalorder %s54, %s55
      %p66 = scmp.eq.s32.totalorder %s20, 0
      %p67 = por %p65, %p66
      %p68 = scmp.ne.s32.totalorder %s54, %s55
      %p69 = scmp.eq.s32.totalorder %s21, 1
      %p70 = por %p68, %p69
      %p72 = scmp.ne.s32.totalorder %s55, %s71
      %p73 = scmp.eq.s32.totalorder %s21, 0
      %p74 = por %p72, %p73
      %s76 = sadd.s32 %s75, 1
      %p79 = scmp.eq.s32.totalorder %s15, 1
      %p80 = scmp.ne.s32.totalorder %s75, %s77
      %p81 = scmp.eq.s32.totalorder %s15, 0
      %p82 = por %p80, %p81
      %p83 = scmp.ne.s32.totalorder %s75, %s77
      %p84 = scmp.eq.s32.totalorder %s20, 1
      %p85 = por %p83, %p84
      %p86 = scmp.ne.s32.totalorder %s77, %s78
      %p87 = scmp.eq.s32.totalorder %s20, 0
      %p88 = por %p86, %p87
      %p89 = scmp.ne.s32.totalorder %s77, %s78
      %p90 = scmp.eq.s32.totalorder %s21, 1
      %p91 = por %p89, %p90
      %p93 = scmp.ne.s32.totalorder %s78, %s92
      %p94 = scmp.eq.s32.totalorder %s21, 0
      %p95 = por %p93, %p94
      %s97 = sadd.s32 %s96, 1
      %p100 = scmp.eq.s32.totalorder %s15, 1
      %p101 = scmp.ne.s32.totalorder %s96, %s98
      %p102 = scmp.eq.s32.totalorder %s15, 0
      %p103 = por %p101, %p102
      %p104 = scmp.ne.s32.totalorder %s96, %s98
      %p105 = scmp.eq.s32.totalorder %s20, 1
      %p106 = por %p104, %p105
      %p107 = scmp.ne.s32.totalorder %s98, %s99
      %p108 = scmp.eq.s32.totalorder %s20, 0
      %p109 = por %p107, %p108
      %p110 = scmp.ne.s32.totalorder %s98, %s99
      %p111 = scmp.eq.s32.totalorder %s21, 1
      %p112 = por %p110, %p111
      %p114 = scmp.ne.s32.totalorder %s99, %s113
      %p115 = scmp.eq.s32.totalorder %s21, 0
      %p116 = por %p114, %p115
      %s118 = sadd.s32 %s117, 1
      %p121 = scmp.eq.s32.totalorder %s15, 1
      %p122 = scmp.ne.s32.totalorder %s117, %s119
      %p123 = scmp.eq.s32.totalorder %s15, 0
      %p124 = por %p122, %p123
      %p125 = scmp.ne.s32.totalorder %s117, %s119
      %p126 = scmp.eq.s32.totalorder %s20, 1
      %p127 = por %p125, %p126
      %p128 = scmp.ne.s32.totalorder %s119, %s120
      %p129 = scmp.eq.s32.totalorder %s20, 0
      %p130 = por %p128, %p129
      %p131 = scmp.ne.s32.totalorder %s119, %s120
      %p132 = scmp.eq.s32.totalorder %s21, 1
      %p133 = por %p131, %p132
      %p135 = scmp.ne.s32.totalorder %s120, %s134
      %p136 = scmp.eq.s32.totalorder %s21, 0
      %p137 = por %p135, %p136
      %s139 = sadd.s32 %s138, 1
      %p142 = scmp.eq.s32.totalorder %s15, 1
      %p143 = scmp.ne.s32.totalorder %s138, %s140
      %p144 = scmp.eq.s32.totalorder %s15, 0
      %p145 = por %p143, %p144
      %p146 = scmp.ne.s32.totalorder %s138, %s140
      %p147 = scmp.eq.s32.totalorder %s20, 1
      %p148 = por %p146, %p147
      %p149 = scmp.ne.s32.totalorder %s140, %s141
      %p150 = scmp.eq.s32.totalorder %s20, 0
      %p151 = por %p149, %p150
      %p152 = scmp.ne.s32.totalorder %s140, %s141
      %p153 = scmp.eq.s32.totalorder %s21, 1
      %p154 = por %p152, %p153
      %p156 = scmp.ne.s32.totalorder %s141, %s155
      %p157 = scmp.eq.s32.totalorder %s21, 0
      %p158 = por %p156, %p157
      %s159 = ssub.s32 %s15, %s22
      %p160 = scmp.eq.s32.totalorder %s159, 0
      %s162 = sadd.s32 %s161, 1
      %s163 = scalar_select %p160, %s161, %s162
      %p166 = pneg %p160
      %p167 = scmp.eq.s32.totalorder %s15, 1
      %p168 = por %p166, %p167
      %p169 = scmp.ne.s32.totalorder %s161, %s164
      %p170 = scmp.eq.s32.totalorder %s15, 0
      %p171 = por %p169, %p170
      %p172 = scmp.ne.s32.totalorder %s161, %s164
      %p173 = scmp.eq.s32.totalorder %s20, 1
      %p174 = por %p172, %p173
      %p175 = scmp.ne.s32.totalorder %s164, %s165
      %p176 = scmp.eq.s32.totalorder %s20, 0
      %p177 = por %p175, %p176
      %p178 = scmp.ne.s32.totalorder %s164, %s165
      %p179 = scmp.eq.s32.totalorder %s21, 1
      %p180 = por %p178, %p179
      %p182 = scmp.ne.s32.totalorder %s165, %s181
      %p183 = scmp.eq.s32.totalorder %s21, 0
      %p184 = por %p182, %p183
      %p185 = scmp.le.s32.totalorder 1, %s15
      %p186 = scmp.lt.s32.totalorder %s15, 3
      %p187 = pnand %p185, %p186
      %p188 = pneg %p187
      // Predicated region
      $region9: #{tpu_custom_call.1} parent=5 // pred_check
        _
      $region10: #{tpu_custom_call.1} parent=5 // pred_check_branch
        %190 = sbr.rel (%p187) target = $region12
      $region11: #{tpu_custom_call.1} parent=5 // pred_region
        %s191 = ssub.s32 %s15, 1
        // Predicated region
        $region13: #{tpu_custom_call.1} parent=11 // pred_check
          %p192 = pneg %p88
        $region14: #{tpu_custom_call.1} parent=11 // pred_check_branch
          %194 = sbr.rel (%p192) target = $region16
        $region15: #{tpu_custom_call.1} parent=11 // pred_region
          _
        $region16: #{tpu_custom_call.1} parent=11 // pred_fallthru
          _
        // Predicated region
        $region17: #{tpu_custom_call.1} parent=11 // pred_check
          %p195 = pneg %p109
        $region18: #{tpu_custom_call.1} parent=11 // pred_check_branch
          %197 = sbr.rel (%p195) target = $region20
        $region19: #{tpu_custom_call.1} parent=11 // pred_region
          _
        $region20: #{tpu_custom_call.1} parent=11 // pred_fallthru
          _
        // Predicated region
        $region21: #{tpu_custom_call.1} parent=11 // pred_check
          %p198 = pneg %p130
        $region22: #{tpu_custom_call.1} parent=11 // pred_check_branch
          %200 = sbr.rel (%p198) target = $region24
        $region23: #{tpu_custom_call.1} parent=11 // pred_region
          _
        $region24: #{tpu_custom_call.1} parent=11 // pred_fallthru
          _
        // Predicated region
        $region25: #{tpu_custom_call.1} parent=11 // pred_check
          %p201 = pneg %p151
        $region26: #{tpu_custom_call.1} parent=11 // pred_check_branch
          %203 = sbr.rel (%p201) target = $region28
        $region27: #{tpu_custom_call.1} parent=11 // pred_region
          _
        $region28: #{tpu_custom_call.1} parent=11 // pred_fallthru
          _
      $region12: #{tpu_custom_call.1} parent=5 // pred_fallthru
        _
      %p204 = scmp.lt.s32.totalorder %s15, 2
      // Predicated region
      $region29: #{tpu_custom_call.1} parent=5 // pred_check
        %p205 = pneg %p204
      $region30: #{tpu_custom_call.1} parent=5 // pred_check_branch
        %207 = sbr.rel (%p205) target = $region32
      $region31: #{tpu_custom_call.1} parent=5 // pred_region
        // Predicated region
        $region33: #{tpu_custom_call.1} parent=31 // pred_check
          %p208 = pneg %p35
        $region34: #{tpu_custom_call.1} parent=31 // pred_check_branch
          %210 = sbr.rel (%p208) target = $region36
        $region35: #{tpu_custom_call.1} parent=31 // pred_region
          %s211 = smul.u32 8, %s15
          %p212 = scmp.lt.s32.totalorder %s211, 15
          %s213 = scalar_select %p212, %s211, 15
          %s214 = smul.addr %s213, 2
          %s215 = smul.addr %s214, 4
          %s216 = scalar_lea.vmem %s0, %s215
          %s217 = smul.u32 8, %s15
        $region36: #{tpu_custom_call.1} parent=31 // pred_fallthru
          _
        // Predicated region
        $region37: #{tpu_custom_call.1} parent=31 // pred_check
          %p218 = pneg %p61
        $region38: #{tpu_custom_call.1} parent=31 // pred_check_branch
          %220 = sbr.rel (%p218) target = $region40
        $region39: #{tpu_custom_call.1} parent=31 // pred_region
          %p221 = scmp.lt.s32.totalorder %s15, 1
          %s222 = scalar_select %p221, %s15, 1
          %s223 = smul.addr %s222, 4
          %s224 = scalar_lea.vmem %s1, %s223
        $region40: #{tpu_custom_call.1} parent=31 // pred_fallthru
          _
      $region32: #{tpu_custom_call.1} parent=5 // pred_fallthru
        _
      %p225 = scmp.le.s32.totalorder 1, %s15
      %p226 = scmp.lt.s32.totalorder %s15, 3
      %p227 = pnand %p225, %p226
      %p228 = pneg %p227
      // Predicated region
      $region41: #{tpu_custom_call.1} parent=5 // pred_check
        _
      $region42: #{tpu_custom_call.1} parent=5 // pred_check_branch
        %230 = sbr.rel (%p227) target = $region44
      $region43: #{tpu_custom_call.1} parent=5 // pred_region
        %s231 = ssub.s32 %s15, 1
        %s232 = smul.u32 8, %s20
        %p233 = scmp.lt.s32.totalorder %s232, 15
        %s234 = scalar_select %p233, %s232, 15
        %s235 = smul.addr %s234, 2
        %s236 = smul.addr %s235, 4
        %s237 = scalar_lea.vmem %s0, %s236
        %p238 = pneg %p41
        %p239 = pneg %p38
        %p240 = scmp.lt.s32.totalorder %s20, 1
        %s241 = scalar_select %p240, %s20, 1
        %s242 = smul.addr %s241, 4
        %s243 = scalar_lea.vmem %s1, %s242
        %p244 = pneg %p67
        %p245 = pneg %p64
        %p246 = pneg %p88
        %p247 = pneg %p85
        %p248 = pneg %p109
        %p249 = pneg %p106
        %p250 = pneg %p130
        %p251 = pneg %p127
        %p252 = pneg %p151
        %p253 = pneg %p148
        %p254 = pneg %p177
        %p255 = pneg %p174
        %s256 = sand.u32 %s164, 1
        %s257 = scalar_lea.sflag [#allocation3], %s256
        %s258 = sand.u32 %s164, 1
        %s259 = smul.addr %s258, 8
        %s260 = scalar_lea.vmem [#allocation2], %s259
        %s261 = smul.u32 8, %s20
        %p262 = scmp.lt.s32.totalorder %s261, 15
        %s263 = scalar_select %p262, %s261, 15
        %s264 = smul.addr %s263, 2
        %s265 = smul.addr %s264, 4
        %s266 = scalar_lea.vmem %s0, %s265
        %s267 = smul.u32 8, %s20
        %p268 = scmp.lt.s32.totalorder %s20, 1
        %s269 = scalar_select %p268, %s20, 1
        %s270 = smul.addr %s269, 4
        %s271 = scalar_lea.vmem %s1, %s270
        %v273 = vld [vmem:[%s271] sm:$0xf]
        %v274 = vld [vmem:[%s4] sm:$0xf]
        %v275 = vld [vmem:[%s4 + $0x4] sm:$0xf]
        %v276 = vld [vmem:[%s5] sm:$0x1]
        %v278 = vlaneseq
        %v279 = vshrl.u32 %v278, 7
        %v280 = vsub.s32 0, %v279
        %v281 = vrot.slane %v276, %v280
        %v285 = vunpack.c.l.b16 %v274
        %v286 = vunpack.c.l.b16 %v275
        %v287 = vpack.c.b16 %v286, %v285
        %vm289 = vcmask 130048
        %v291 = vsel %vm289, %v273, 0
        %293 = vmatprep.subr.bf16.mxu0 0
        %294 = vmatpush1.bf16.msra.mxu0 0
        %295 = vmatprep.subr.bf16.mxu0 0
        %296 = vmatpush1.bf16.msra.mxu0 0
        %297 = vmatprep.subr.bf16.mxu0 0
        %298 = vmatpush1.bf16.msra.mxu0 0
        %299 = vmatprep.subr.bf16.mxu0 0
        %300 = vmatpush1.bf16.msra.mxu0 0
        %301 = vmatprep.subr.bf16.mxu0 0
        %302 = vmatpush1.bf16.msra.mxu0 0
        %303 = vmatprep.subr.bf16.mxu0 0
        %304 = vmatpush1.bf16.msra.mxu0 0
        %305 = vmatprep.subr.bf16.mxu0 0
        %306 = vmatpush1.bf16.msra.mxu0 0
        %307 = vmatprep.subr.bf16.mxu0 0
        %308 = vmatpush1.bf16.msra.mxu0 %v287
        %309 = vmatprep.subr.bf16.mxu0 0
        %310 = vmatpush2.bf16.msra.mxu0 0
        %311 = vmatprep.subr.bf16.mxu0 0
        %312 = vmatpush2.bf16.msra.mxu0 0
        %313 = vmatprep.subr.bf16.mxu0 0
        %314 = vmatpush2.bf16.msra.mxu0 0
        %315 = vmatprep.subr.bf16.mxu0 0
        %316 = vmatpush2.bf16.msra.mxu0 0
        %317 = vmatprep.subr.bf16.mxu0 0
        %318 = vmatpush2.bf16.msra.mxu0 0
        %319 = vmatprep.subr.bf16.mxu0 0
        %320 = vmatpush2.bf16.msra.mxu0 0
        %321 = vmatprep.subr.bf16.mxu0 0
        %322 = vmatpush2.bf16.msra.mxu0 0
        %323 = vmatprep.subr.bf16.mxu0 0
        %324 = vmatpush2.bf16.msra.mxu0 0
        %325 = vmatprep.mubr.bf16.mxu0 0
        %326 = vmatmul.mubr.bf16.gmra.mxu0 %v291
        %v327 = vpop.f32.mrf.mxu0
        %v328 = vadd.f32 %v281, %v327
        %v329 = vpop.f32.mrf.mxu0
        %v330 = vpop.f32.mrf.mxu0
        %v331 = vpop.f32.mrf.mxu0
        %332 = vdwg.mxu0
        %v333 = vld [vmem:[%s2] sm:$0x1]
        %335 = vset.pattern.permute.xlu0 0
        %336 = vperm.xlu0 %335, %v328
        %v337 = vpop.permute.xlu0 %336
        %v339 = vlaneseq
        %v340 = vshrl.u32 %v339, 7
        %v341 = vsub.s32 0, %v340
        %v342 = vrot.slane %v333, %v341
        %v343 = vmul.f32 %v337, %v342
        %v344 = vadd.f32 %v343, 0.0
        %v345 = vld [vmem:[%s3] sm:$0x1]
        %v347 = vlaneseq
        %v348 = vshrl.u32 %v347, 7
        %v349 = vsub.s32 0, %v348
        %v350 = vrot.slane %v345, %v349
        %v352 = vmul.f32 %v328, %v350
        %v353 = vadd.f32 %v352, 0.0
        %v354 = vld [vmem:[%s2 + $0x1] sm:$0x1]
        %355 = vset.pattern.permute.xlu0 1
        %356 = vperm.xlu0 %355, %v328
        %v357 = vpop.permute.xlu0 %356
        %v359 = vlaneseq
        %v360 = vshrl.u32 %v359, 7
        %v361 = vsub.s32 0, %v360
        %v362 = vrot.slane %v354, %v361
        %v363 = vmul.f32 %v357, %v362
        %v364 = vadd.f32 %v344, %v363
        %366 = vrot.lane.b32.xlu0 %v352, 127
        %v367 = vpop.permute.xlu0 %366
        %v369 = vadd.f32 %v353, %v367
        %v370 = vld [vmem:[%s2 + $0x2] sm:$0x1]
        %371 = vset.pattern.permute.xlu0 2
        %372 = vperm.xlu0 %371, %v328
        %v373 = vpop.permute.xlu0 %372
        %v375 = vlaneseq
        %v376 = vshrl.u32 %v375, 7
        %v377 = vsub.s32 0, %v376
        %v378 = vrot.slane %v370, %v377
        %v379 = vmul.f32 %v373, %v378
        %v380 = vadd.f32 %v364, %v379
        %381 = vrot.lane.b32.xlu0 %v352, 126
        %v382 = vpop.permute.xlu0 %381
        %v384 = vadd.f32 %v369, %v382
        %v385 = vld [vmem:[%s2 + $0x3] sm:$0x1]
        %386 = vset.pattern.permute.xlu0 3
        %387 = vperm.xlu0 %386, %v328
        %v388 = vpop.permute.xlu0 %387
        %v390 = vlaneseq
        %v391 = vshrl.u32 %v390, 7
        %v392 = vsub.s32 0, %v391
        %v393 = vrot.slane %v385, %v392
        %v394 = vmul.f32 %v388, %v393
        %v395 = vadd.f32 %v380, %v394
        %396 = vrot.lane.b32.xlu0 %v352, 125
        %v397 = vpop.permute.xlu0 %396
        %v399 = vadd.f32 %v384, %v397
        %v400 = vld [vmem:[%s266] sm:$0x1]
        %v401 = vld [vmem:[%s266 + $0x8] sm:$0x1]
        %v402 = vld [vmem:[%s266 + $0x10] sm:$0x1]
        %v403 = vld [vmem:[%s266 + $0x18] sm:$0x1]
        %v404 = vld [vmem:[%s266 + $0x20] sm:$0x1]
        %v405 = vld [vmem:[%s266 + $0x28] sm:$0x1]
        %v406 = vld [vmem:[%s266 + $0x30] sm:$0x1]
        %v407 = vld [vmem:[%s266 + $0x38] sm:$0x1]
        %v408 = vunpack.c.l.bf16 %v400
        %v409 = vunpack.c.l.bf16 %v401
        %v410 = vunpack.c.l.bf16 %v402
        %v411 = vunpack.c.l.bf16 %v403
        %v412 = vunpack.c.l.bf16 %v404
        %v413 = vunpack.c.l.bf16 %v405
        %v414 = vunpack.c.l.bf16 %v406
        %v415 = vunpack.c.l.bf16 %v407
        %417 = vset.pattern.permute.xlu0 0
        %418 = vperm.xlu0 %417, %v395
        %v419 = vpop.permute.xlu0 %418
        %v420 = vrot.slane %v419, 1
        %v421 = vrot.slane %v419, 2
        %v422 = vrot.slane %v419, 3
        %v423 = vrot.slane %v419, 4
        %v424 = vrot.slane %v419, 5
        %v425 = vrot.slane %v419, 6
        %v426 = vrot.slane %v419, 7
        %v435 = vmul.f32 %v408, %v419
        %v436 = vmul.f32 %v409, %v420
        %v437 = vmul.f32 %v410, %v421
        %v438 = vmul.f32 %v411, %v422
        %v439 = vmul.f32 %v412, %v423
        %v440 = vmul.f32 %v413, %v424
        %v441 = vmul.f32 %v414, %v425
        %v442 = vmul.f32 %v415, %v426
        %v443 = vadd.f32 %v435, 0.0
        %v444 = vadd.f32 %v436, 0.0
        %v445 = vadd.f32 %v437, 0.0
        %v446 = vadd.f32 %v438, 0.0
        %v447 = vadd.f32 %v439, 0.0
        %v448 = vadd.f32 %v440, 0.0
        %v449 = vadd.f32 %v441, 0.0
        %v450 = vadd.f32 %v442, 0.0
        %451 = vset.pattern.permute.xlu0 1
        %452 = vperm.xlu0 %451, %v395
        %v453 = vpop.permute.xlu0 %452
        %v454 = vrot.slane %v453, 7
        %v455 = vrot.slane %v453, 1
        %v456 = vrot.slane %v453, 2
        %v457 = vrot.slane %v453, 3
        %v458 = vrot.slane %v453, 4
        %v459 = vrot.slane %v453, 5
        %v460 = vrot.slane %v453, 6
        %v469 = vmul.f32 %v408, %v454
        %v470 = vmul.f32 %v409, %v453
        %v471 = vmul.f32 %v410, %v455
        %v472 = vmul.f32 %v411, %v456
        %v473 = vmul.f32 %v412, %v457
        %v474 = vmul.f32 %v413, %v458
        %v475 = vmul.f32 %v414, %v459
        %v476 = vmul.f32 %v415, %v460
        %v485 = vrot.slane %v469, 1
        %v486 = vrot.slane %v470, 1
        %v487 = vrot.slane %v471, 1
        %v488 = vrot.slane %v472, 1
        %v489 = vrot.slane %v473, 1
        %v490 = vrot.slane %v474, 1
        %v491 = vrot.slane %v475, 1
        %v492 = vrot.slane %v476, 1
        %v501 = vadd.f32 %v443, %v485
        %v502 = vadd.f32 %v444, %v486
        %v503 = vadd.f32 %v445, %v487
        %v504 = vadd.f32 %v446, %v488
        %v505 = vadd.f32 %v447, %v489
        %v506 = vadd.f32 %v448, %v490
        %v507 = vadd.f32 %v449, %v491
        %v508 = vadd.f32 %v450, %v492
        %v509 = vld [vmem:[%s266] sm:$0x2]
        %v510 = vld [vmem:[%s266 + $0x8] sm:$0x2]
        %v511 = vld [vmem:[%s266 + $0x10] sm:$0x2]
        %v512 = vld [vmem:[%s266 + $0x18] sm:$0x2]
        %v513 = vld [vmem:[%s266 + $0x20] sm:$0x2]
        %v514 = vld [vmem:[%s266 + $0x28] sm:$0x2]
        %v515 = vld [vmem:[%s266 + $0x30] sm:$0x2]
        %v516 = vld [vmem:[%s266 + $0x38] sm:$0x2]
        %v517 = vunpack.c.l.bf16 %v509
        %v518 = vunpack.c.l.bf16 %v510
        %v519 = vunpack.c.l.bf16 %v511
        %v520 = vunpack.c.l.bf16 %v512
        %v521 = vunpack.c.l.bf16 %v513
        %v522 = vunpack.c.l.bf16 %v514
        %v523 = vunpack.c.l.bf16 %v515
        %v524 = vunpack.c.l.bf16 %v516
        %525 = vset.pattern.permute.xlu0 2
        %526 = vperm.xlu0 %525, %v395
        %v527 = vpop.permute.xlu0 %526
        %v528 = vrot.slane %v527, 6
        %v529 = vrot.slane %v527, 7
        %v530 = vrot.slane %v527, 1
        %v531 = vrot.slane %v527, 2
        %v532 = vrot.slane %v527, 3
        %v533 = vrot.slane %v527, 4
        %v534 = vrot.slane %v527, 5
        %v543 = vmul.f32 %v517, %v528
        %v544 = vmul.f32 %v518, %v529
        %v545 = vmul.f32 %v519, %v527
        %v546 = vmul.f32 %v520, %v530
        %v547 = vmul.f32 %v521, %v531
        %v548 = vmul.f32 %v522, %v532
        %v549 = vmul.f32 %v523, %v533
        %v550 = vmul.f32 %v524, %v534
        %v559 = vrot.slane %v543, 2
        %v560 = vrot.slane %v544, 2
        %v561 = vrot.slane %v545, 2
        %v562 = vrot.slane %v546, 2
        %v563 = vrot.slane %v547, 2
        %v564 = vrot.slane %v548, 2
        %v565 = vrot.slane %v549, 2
        %v566 = vrot.slane %v550, 2
        %v575 = vadd.f32 %v501, %v559
        %v576 = vadd.f32 %v502, %v560
        %v577 = vadd.f32 %v503, %v561
        %v578 = vadd.f32 %v504, %v562
        %v579 = vadd.f32 %v505, %v563
        %v580 = vadd.f32 %v506, %v564
        %v581 = vadd.f32 %v507, %v565
        %v582 = vadd.f32 %v508, %v566
        %583 = vset.pattern.permute.xlu0 3
        %584 = vperm.xlu0 %583, %v395
        %v585 = vpop.permute.xlu0 %584
        %v586 = vrot.slane %v585, 5
        %v587 = vrot.slane %v585, 6
        %v588 = vrot.slane %v585, 7
        %v589 = vrot.slane %v585, 1
        %v590 = vrot.slane %v585, 2
        %v591 = vrot.slane %v585, 3
        %v592 = vrot.slane %v585, 4
        %v601 = vmul.f32 %v517, %v586
        %v602 = vmul.f32 %v518, %v587
        %v603 = vmul.f32 %v519, %v588
        %v604 = vmul.f32 %v520, %v585
        %v605 = vmul.f32 %v521, %v589
        %v606 = vmul.f32 %v522, %v590
        %v607 = vmul.f32 %v523, %v591
        %v608 = vmul.f32 %v524, %v592
        %v617 = vrot.slane %v601, 3
        %v618 = vrot.slane %v602, 3
        %v619 = vrot.slane %v603, 3
        %v620 = vrot.slane %v604, 3
        %v621 = vrot.slane %v605, 3
        %v622 = vrot.slane %v606, 3
        %v623 = vrot.slane %v607, 3
        %v624 = vrot.slane %v608, 3
        %v633 = vadd.f32 %v575, %v617
        %v634 = vadd.f32 %v576, %v618
        %v635 = vadd.f32 %v577, %v619
        %v636 = vadd.f32 %v578, %v620
        %v637 = vadd.f32 %v579, %v621
        %v638 = vadd.f32 %v580, %v622
        %v639 = vadd.f32 %v581, %v623
        %v640 = vadd.f32 %v582, %v624
        %v641 = vld [vmem:[%s266] sm:$0x4]
        %v642 = vld [vmem:[%s266 + $0x8] sm:$0x4]
        %v643 = vld [vmem:[%s266 + $0x10] sm:$0x4]
        %v644 = vld [vmem:[%s266 + $0x18] sm:$0x4]
        %v645 = vld [vmem:[%s266 + $0x20] sm:$0x4]
        %v646 = vld [vmem:[%s266 + $0x28] sm:$0x4]
        %v647 = vld [vmem:[%s266 + $0x30] sm:$0x4]
        %v648 = vld [vmem:[%s266 + $0x38] sm:$0x4]
        %v649 = vunpack.c.l.bf16 %v641
        %v650 = vunpack.c.l.bf16 %v642
        %v651 = vunpack.c.l.bf16 %v643
        %v652 = vunpack.c.l.bf16 %v644
        %v653 = vunpack.c.l.bf16 %v645
        %v654 = vunpack.c.l.bf16 %v646
        %v655 = vunpack.c.l.bf16 %v647
        %v656 = vunpack.c.l.bf16 %v648
        %657 = vset.pattern.permute.xlu0 4
        %658 = vperm.xlu0 %657, %v395
        %v659 = vpop.permute.xlu0 %658
        %v660 = vrot.slane %v659, 4
        %v661 = vrot.slane %v659, 5
        %v662 = vrot.slane %v659, 6
        %v663 = vrot.slane %v659, 7
        %v664 = vrot.slane %v659, 1
        %v665 = vrot.slane %v659, 2
        %v666 = vrot.slane %v659, 3
        %v675 = vmul.f32 %v649, %v660
        %v676 = vmul.f32 %v650, %v661
        %v677 = vmul.f32 %v651, %v662
        %v678 = vmul.f32 %v652, %v663
        %v679 = vmul.f32 %v653, %v659
        %v680 = vmul.f32 %v654, %v664
        %v681 = vmul.f32 %v655, %v665
        %v682 = vmul.f32 %v656, %v666
        %v691 = vrot.slane %v675, 4
        %v692 = vrot.slane %v676, 4
        %v693 = vrot.slane %v677, 4
        %v694 = vrot.slane %v678, 4
        %v695 = vrot.slane %v679, 4
        %v696 = vrot.slane %v680, 4
        %v697 = vrot.slane %v681, 4
        %v698 = vrot.slane %v682, 4
        %v707 = vadd.f32 %v633, %v691
        %v708 = vadd.f32 %v634, %v692
        %v709 = vadd.f32 %v635, %v693
        %v710 = vadd.f32 %v636, %v694
        %v711 = vadd.f32 %v637, %v695
        %v712 = vadd.f32 %v638, %v696
        %v713 = vadd.f32 %v639, %v697
        %v714 = vadd.f32 %v640, %v698
        %715 = vset.pattern.permute.xlu0 5
        %716 = vperm.xlu0 %715, %v395
        %v717 = vpop.permute.xlu0 %716
        %v718 = vrot.slane %v717, 3
        %v719 = vrot.slane %v717, 4
        %v720 = vrot.slane %v717, 5
        %v721 = vrot.slane %v717, 6
        %v722 = vrot.slane %v717, 7
        %v723 = vrot.slane %v717, 1
        %v724 = vrot.slane %v717, 2
        %v733 = vmul.f32 %v649, %v718
        %v734 = vmul.f32 %v650, %v719
        %v735 = vmul.f32 %v651, %v720
        %v736 = vmul.f32 %v652, %v721
        %v737 = vmul.f32 %v653, %v722
        %v738 = vmul.f32 %v654, %v717
        %v739 = vmul.f32 %v655, %v723
        %v740 = vmul.f32 %v656, %v724
        %v749 = vrot.slane %v733, 5
        %v750 = vrot.slane %v734, 5
        %v751 = vrot.slane %v735, 5
        %v752 = vrot.slane %v736, 5
        %v753 = vrot.slane %v737, 5
        %v754 = vrot.slane %v738, 5
        %v755 = vrot.slane %v739, 5
        %v756 = vrot.slane %v740, 5
        %v765 = vadd.f32 %v707, %v749
        %v766 = vadd.f32 %v708, %v750
        %v767 = vadd.f32 %v709, %v751
        %v768 = vadd.f32 %v710, %v752
        %v769 = vadd.f32 %v711, %v753
        %v770 = vadd.f32 %v712, %v754
        %v771 = vadd.f32 %v713, %v755
        %v772 = vadd.f32 %v714, %v756
        %v773 = vld [vmem:[%s266] sm:$0x8]
        %v774 = vld [vmem:[%s266 + $0x8] sm:$0x8]
        %v775 = vld [vmem:[%s266 + $0x10] sm:$0x8]
        %v776 = vld [vmem:[%s266 + $0x18] sm:$0x8]
        %v777 = vld [vmem:[%s266 + $0x20] sm:$0x8]
        %v778 = vld [vmem:[%s266 + $0x28] sm:$0x8]
        %v779 = vld [vmem:[%s266 + $0x30] sm:$0x8]
        %v780 = vld [vmem:[%s266 + $0x38] sm:$0x8]
        %v781 = vunpack.c.l.bf16 %v773
        %v782 = vunpack.c.l.bf16 %v774
        %v783 = vunpack.c.l.bf16 %v775
        %v784 = vunpack.c.l.bf16 %v776
        %v785 = vunpack.c.l.bf16 %v777
        %v786 = vunpack.c.l.bf16 %v778
        %v787 = vunpack.c.l.bf16 %v779
        %v788 = vunpack.c.l.bf16 %v780
        %789 = vset.pattern.permute.xlu0 6
        %790 = vperm.xlu0 %789, %v395
        %v791 = vpop.permute.xlu0 %790
        %v792 = vrot.slane %v791, 2
        %v793 = vrot.slane %v791, 3
        %v794 = vrot.slane %v791, 4
        %v795 = vrot.slane %v791, 5
        %v796 = vrot.slane %v791, 6
        %v797 = vrot.slane %v791, 7
        %v798 = vrot.slane %v791, 1
        %v807 = vmul.f32 %v781, %v792
        %v808 = vmul.f32 %v782, %v793
        %v809 = vmul.f32 %v783, %v794
        %v810 = vmul.f32 %v784, %v795
        %v811 = vmul.f32 %v785, %v796
        %v812 = vmul.f32 %v786, %v797
        %v813 = vmul.f32 %v787, %v791
        %v814 = vmul.f32 %v788, %v798
        %v823 = vrot.slane %v807, 6
        %v824 = vrot.slane %v808, 6
        %v825 = vrot.slane %v809, 6
        %v826 = vrot.slane %v810, 6
        %v827 = vrot.slane %v811, 6
        %v828 = vrot.slane %v812, 6
        %v829 = vrot.slane %v813, 6
        %v830 = vrot.slane %v814, 6
        %v839 = vadd.f32 %v765, %v823
        %v840 = vadd.f32 %v766, %v824
        %v841 = vadd.f32 %v767, %v825
        %v842 = vadd.f32 %v768, %v826
        %v843 = vadd.f32 %v769, %v827
        %v844 = vadd.f32 %v770, %v828
        %v845 = vadd.f32 %v771, %v829
        %v846 = vadd.f32 %v772, %v830
        %847 = vset.pattern.permute.xlu0 7
        %848 = vperm.xlu0 %847, %v395
        %v849 = vpop.permute.xlu0 %848
        %v850 = vrot.slane %v849, 1
        %v851 = vrot.slane %v849, 2
        %v852 = vrot.slane %v849, 3
        %v853 = vrot.slane %v849, 4
        %v854 = vrot.slane %v849, 5
        %v855 = vrot.slane %v849, 6
        %v856 = vrot.slane %v849, 7
        %v865 = vmul.f32 %v781, %v850
        %v866 = vmul.f32 %v782, %v851
        %v867 = vmul.f32 %v783, %v852
        %v868 = vmul.f32 %v784, %v853
        %v869 = vmul.f32 %v785, %v854
        %v870 = vmul.f32 %v786, %v855
        %v871 = vmul.f32 %v787, %v856
        %v872 = vmul.f32 %v788, %v849
        %v881 = vrot.slane %v865, 7
        %v882 = vrot.slane %v866, 7
        %v883 = vrot.slane %v867, 7
        %v884 = vrot.slane %v868, 7
        %v885 = vrot.slane %v869, 7
        %v886 = vrot.slane %v870, 7
        %v887 = vrot.slane %v871, 7
        %v888 = vrot.slane %v872, 7
        %v897 = vadd.f32 %v839, %v881
        %v898 = vadd.f32 %v840, %v882
        %v899 = vadd.f32 %v841, %v883
        %v900 = vadd.f32 %v842, %v884
        %v901 = vadd.f32 %v843, %v885
        %v902 = vadd.f32 %v844, %v886
        %v903 = vadd.f32 %v845, %v887
        %v904 = vadd.f32 %v846, %v888
        %v905 = vld [vmem:[%s266 + $0x4] sm:$0x1]
        %v906 = vld [vmem:[%s266 + $0xc] sm:$0x1]
        %v907 = vld [vmem:[%s266 + $0x14] sm:$0x1]
        %v908 = vld [vmem:[%s266 + $0x1c] sm:$0x1]
        %v909 = vld [vmem:[%s266 + $0x24] sm:$0x1]
        %v910 = vld [vmem:[%s266 + $0x2c] sm:$0x1]
        %v911 = vld [vmem:[%s266 + $0x34] sm:$0x1]
        %v912 = vld [vmem:[%s266 + $0x3c] sm:$0x1]
        %v913 = vunpack.c.l.bf16 %v905
        %v914 = vunpack.c.l.bf16 %v906
        %v915 = vunpack.c.l.bf16 %v907
        %v916 = vunpack.c.l.bf16 %v908
        %v917 = vunpack.c.l.bf16 %v909
        %v918 = vunpack.c.l.bf16 %v910
        %v919 = vunpack.c.l.bf16 %v911
        %v920 = vunpack.c.l.bf16 %v912
        %921 = vset.pattern.permute.xlu0 8
        %922 = vperm.xlu0 %921, %v395
        %v923 = vpop.permute.xlu0 %922
        %v924 = vrot.slane %v923, 1
        %v925 = vrot.slane %v923, 2
        %v926 = vrot.slane %v923, 3
        %v927 = vrot.slane %v923, 4
        %v928 = vrot.slane %v923, 5
        %v929 = vrot.slane %v923, 6
        %v930 = vrot.slane %v923, 7
        %v939 = vmul.f32 %v913, %v923
        %v940 = vmul.f32 %v914, %v924
        %v941 = vmul.f32 %v915, %v925
        %v942 = vmul.f32 %v916, %v926
        %v943 = vmul.f32 %v917, %v927
        %v944 = vmul.f32 %v918, %v928
        %v945 = vmul.f32 %v919, %v929
        %v946 = vmul.f32 %v920, %v930
        %v947 = vadd.f32 %v897, %v939
        %v948 = vadd.f32 %v898, %v940
        %v949 = vadd.f32 %v899, %v941
        %v950 = vadd.f32 %v900, %v942
        %v951 = vadd.f32 %v901, %v943
        %v952 = vadd.f32 %v902, %v944
        %v953 = vadd.f32 %v903, %v945
        %v954 = vadd.f32 %v904, %v946
        %955 = vset.pattern.permute.xlu0 9
        %956 = vperm.xlu0 %955, %v395
        %v957 = vpop.permute.xlu0 %956
        %v958 = vrot.slane %v957, 7
        %v959 = vrot.slane %v957, 1
        %v960 = vrot.slane %v957, 2
        %v961 = vrot.slane %v957, 3
        %v962 = vrot.slane %v957, 4
        %v963 = vrot.slane %v957, 5
        %v964 = vrot.slane %v957, 6
        %v973 = vmul.f32 %v913, %v958
        %v974 = vmul.f32 %v914, %v957
        %v975 = vmul.f32 %v915, %v959
        %v976 = vmul.f32 %v916, %v960
        %v977 = vmul.f32 %v917, %v961
        %v978 = vmul.f32 %v918, %v962
        %v979 = vmul.f32 %v919, %v963
        %v980 = vmul.f32 %v920, %v964
        %v989 = vrot.slane %v973, 1
        %v990 = vrot.slane %v974, 1
        %v991 = vrot.slane %v975, 1
        %v992 = vrot.slane %v976, 1
        %v993 = vrot.slane %v977, 1
        %v994 = vrot.slane %v978, 1
        %v995 = vrot.slane %v979, 1
        %v996 = vrot.slane %v980, 1
        %v1005 = vadd.f32 %v947, %v989
        %v1006 = vadd.f32 %v948, %v990
        %v1007 = vadd.f32 %v949, %v991
        %v1008 = vadd.f32 %v950, %v992
        %v1009 = vadd.f32 %v951, %v993
        %v1010 = vadd.f32 %v952, %v994
        %v1011 = vadd.f32 %v953, %v995
        %v1012 = vadd.f32 %v954, %v996
        %1014 = vset.pattern.permute.xlu0 0
        %1015 = vperm.xlu0 %1014, %v399
        %v1016 = vpop.permute.xlu0 %1015
        %v1017 = vrot.slane %v1016, 1
        %v1018 = vrot.slane %v1016, 2
        %v1019 = vrot.slane %v1016, 3
        %v1020 = vrot.slane %v1016, 4
        %v1021 = vrot.slane %v1016, 5
        %v1022 = vrot.slane %v1016, 6
        %v1023 = vrot.slane %v1016, 7
        %v1032 = vadd.f32 %v1005, %v1016
        %v1033 = vadd.f32 %v1006, %v1017
        %v1034 = vadd.f32 %v1007, %v1018
        %v1035 = vadd.f32 %v1008, %v1019
        %v1036 = vadd.f32 %v1009, %v1020
        %v1037 = vadd.f32 %v1010, %v1021
        %v1038 = vadd.f32 %v1011, %v1022
        %v1039 = vadd.f32 %v1012, %v1023
        %v1048 = vrot.slane %v1033, 7
        %vm1049 = vcmask 1041409
        %v1050 = vsel %vm1049, %v1048, %v1032
        %v1051 = vrot.slane %v1034, 6
        %vm1052 = vcmask 1042434
        %v1053 = vsel %vm1052, %v1051, %v1050
        %v1054 = vrot.slane %v1035, 5
        %vm1055 = vcmask 1043459
        %v1056 = vsel %vm1055, %v1054, %v1053
        %v1057 = vrot.slane %v1036, 4
        %vm1058 = vcmask 1044484
        %v1059 = vsel %vm1058, %v1057, %v1056
        %v1060 = vrot.slane %v1037, 3
        %vm1061 = vcmask 1045509
        %v1062 = vsel %vm1061, %v1060, %v1059
        %v1063 = vrot.slane %v1038, 2
        %vm1064 = vcmask 1046534
        %v1065 = vsel %vm1064, %v1063, %v1062
        %v1066 = vrot.slane %v1039, 1
        %vm1067 = vcmask 1047559
        %v1068 = vsel %vm1067, %v1066, %v1065
        %1070 = vst [vmem:[%s260] sm:$0xff] %v1068
        %s1071 = sand.u32 %s164, 1
        %s1072 = scalar_lea.sflag [#allocation3], %s1071
        %s1073 = sand.u32 %s164, 1
        %s1074 = smul.addr %s1073, 8
        %s1075 = scalar_lea.vmem [#allocation2], %s1074
        // Predicated region
        $region45: #{tpu_custom_call.1} parent=43 // pred_check
          %p1076 = pneg %p174
        $region46: #{tpu_custom_call.1} parent=43 // pred_check_branch
          %1078 = sbr.rel (%p1076) target = $region48
        $region47: #{tpu_custom_call.1} parent=43 // pred_region
          %s1080 = ssub.s32 128, 128
          %1081 = vsyncadd %s1072, %s1080
          %s1082 = smul.addr %s20, 128
          %s1083 = scalar_lea.hbm %s6, %s1082
          %s1085 = sshll.u32 %s1075, 4
          %s1086 = int_to_ptr.vmem [resolvable:$true] %s1085
          %1088 = dma.vmem_to_hbm [thread:$0]  %s1086, 128, %s1083, %s1072
        $region48: #{tpu_custom_call.1} parent=43 // pred_fallthru
          _
      $region44: #{tpu_custom_call.1} parent=5 // pred_fallthru
        _
      %p1089 = scmp.le.s32.totalorder 2, %s15
      // Predicated region
      $region49: #{tpu_custom_call.1} parent=5 // pred_check
        %p1090 = pneg %p1089
      $region50: #{tpu_custom_call.1} parent=5 // pred_check_branch
        %1092 = sbr.rel (%p1090) target = $region52
      $region51: #{tpu_custom_call.1} parent=5 // pred_region
        %s1093 = ssub.s32 %s15, 2
        // Predicated region
        $region53: #{tpu_custom_call.1} parent=51 // pred_check
          %p1094 = pneg %p180
        $region54: #{tpu_custom_call.1} parent=51 // pred_check_branch
          %1096 = sbr.rel (%p1094) target = $region56
        $region55: #{tpu_custom_call.1} parent=51 // pred_region
          %s1097 = sand.u32 %s165, 1
          %s1098 = scalar_lea.sflag [#allocation3], %s1097
          %s1099 = sand.u32 %s165, 1
          %s1100 = smul.addr %s1099, 8
          %s1101 = scalar_lea.vmem [#allocation2], %s1100
          %1102 = dma.done %s1098, 128
        $region56: #{tpu_custom_call.1} parent=51 // pred_fallthru
          _
      $region52: #{tpu_custom_call.1} parent=5 // pred_fallthru
        _
    $region6: #{tpu_custom_call.1} parent=1 // loop_footer
      %s19 = sadd.s32 1, %s15
    $region7: #{tpu_custom_call.1} parent=1 // loop_footer_branch
      %14 = sbr.rel target = $region3
    $region8: #{tpu_custom_call.1} parent=1 // loop_exit
      _
    %1103 = vsyncpa [#allocation3], 1
    %s1104 = scalar_lea.sflag [#allocation3], 1
    %1105 = vsyncpa %s1104, 1

</llo_original>
